<compile_context>
chip_gen: v7x
topology: tpu7x:2x2x1
jax: 0.10.0
libtpu: 0.0.40
codegen_flags: <defaults>
</compile_context>

<pallas_src>
import jax
import jax.numpy as jnp
from jax import lax
from jax.experimental import pallas as pl
from jax.experimental.pallas import tpu as pltpu


def _conv1x1_kernel(x_ref, w_ref, b_ref, o_ref):
    """One batch element per grid step.

    x_ref : (1, Cin, HW)   one image; channels on sublanes, pixels on lanes
    w_ref : (Cout, Cin)    1x1 conv weight (invariant across the grid)
    b_ref : (Cout, 1)      bias; per-row scalar broadcast along lanes
    o_ref : (1, Cout, HW)  output tile, lane-dense (HW is a multiple of 128)
    """
    x = x_ref[0]                                                  # (Cin, HW)
    acc = jnp.dot(w_ref[...], x, preferred_element_type=jnp.float32)
    acc = acc + b_ref[...].astype(jnp.float32)                    # (Cout,1) -> (Cout,HW)
    o_ref[0] = acc.astype(o_ref.dtype)


def discriminator2_forward(x_nchw, params):
    """Matches Discriminator2.forward: Conv2d(3, 32, 1, 1).  x: (N, 3, H, W)."""
    w, b = params                                  # w: (Cout, Cin, 1, 1), b: (Cout,)
    N, Cin, H, W = x_nchw.shape
    Cout = w.shape[0]
    HW = H * W

    # Free (contiguous) reshapes only -- no transposes, no jnp.pad.
    x_flat = x_nchw.reshape(N, Cin, HW)
    w2d = w.reshape(Cout, Cin)
    b2d = b.reshape(Cout, 1)

    out = pl.pallas_call(
        _conv1x1_kernel,
        out_shape=jax.ShapeDtypeStruct((N, Cout, HW), x_nchw.dtype),
        grid_spec=pltpu.PrefetchScalarGridSpec(
            num_scalar_prefetch=0,
            grid=(N,),
            in_specs=[
                pl.BlockSpec((1, Cin, HW), lambda n: (n, 0, 0)),
                pl.BlockSpec((Cout, Cin), lambda n: (0, 0)),   # grid-invariant
                pl.BlockSpec((Cout, 1), lambda n: (0, 0)),     # grid-invariant
            ],
            out_specs=pl.BlockSpec((1, Cout, HW), lambda n: (n, 0, 0)),
        ),
        compiler_params=pltpu.CompilerParams(
            # Batch axis parallel: on v7x each TensorCore takes one image.
            dimension_semantics=("parallel",)),
    )(x_flat, w2d, b2d)

    return out.reshape(N, Cout, H, W)


def init_params(key):
    k1, k2 = jax.random.split(key)
    # Shapes from nn.Conv2d(3, 32, 1, 1): OIHW weight + bias.
    w = jax.random.normal(k1, (32, 3, 1, 1), jnp.float32) * 0.1
    b = jax.random.normal(k2, (32,), jnp.float32) * 0.1
    return (w, b)


def _reference_forward(x_nchw, params):
    """Pure-JAX reference (lax.conv) for a correctness check."""
    w, b = params
    y = lax.conv_general_dilated(
        x_nchw, w, window_strides=(1, 1), padding=((0, 0), (0, 0)),
        dimension_numbers=("NCHW", "OIHW", "NCHW"))
    return y + b[None, :, None, None]


if __name__ == "__main__":
    key = jax.random.PRNGKey(0)
    kx, kp = jax.random.split(key)
    x = jax.random.normal(kx, (2, 3, 16, 16), jnp.float32)   # NCHW, small shapes
    params = init_params(kp)

    out = discriminator2_forward(x, params)
    out = jax.block_until_ready(out)

    ref = _reference_forward(x, params)
    assert out.shape == (2, 32, 16, 16)
    assert jnp.allclose(out, ref, atol=1e-4, rtol=1e-4)

    print("KERNEL_OK")
</pallas_src>

<mosaic_0001>
module attributes {stable_mosaic.version = 11 : i64} {
  func.func @_conv1x1_kernel(%arg0: i32, %arg1: memref<1x3x256xf32, #tpu.memory_space<vmem>>, %arg2: memref<32x3xf32, #tpu.memory_space<vmem>>, %arg3: memref<32x1xf32, #tpu.memory_space<vmem>>, %arg4: memref<1x32x256xf32, #tpu.memory_space<vmem>>) attributes {dimension_semantics = [#tpu.dimension_semantics<parallel>], iteration_bounds = array<i64: 2>, scalar_prefetch = 0 : i64, scratch_operands = 0 : i64, tpu.core_type = #tpu.core_type<tc>, window_params = [{transform_indices = @transform_0, window_bounds = array<i64: 1, 3, 256>}, {pipeline_mode = #tpu.pipeline_mode<synchronous>, transform_indices = @transform_1, window_bounds = array<i64: 32, 3>}, {pipeline_mode = #tpu.pipeline_mode<synchronous>, transform_indices = @transform_2, window_bounds = array<i64: 32, 1>}, {transform_indices = @transform_3, window_bounds = array<i64: 1, 32, 256>}]} {
    %c0 = arith.constant 0 : index
    %c0_0 = arith.constant 0 : index
    %c0_1 = arith.constant 0 : index
    %0 = vector.load %arg1[%c0, %c0_0, %c0_1] : memref<1x3x256xf32, #tpu.memory_space<vmem>>, vector<1x3x256xf32>
    %1 = vector.shape_cast %0 : vector<1x3x256xf32> to vector<3x256xf32>
    %c0_2 = arith.constant 0 : index
    %c0_3 = arith.constant 0 : index
    %2 = vector.load %arg2[%c0_2, %c0_3] : memref<32x3xf32, #tpu.memory_space<vmem>>, vector<32x3xf32>
    %cst = arith.constant dense<0.000000e+00> : vector<32x256xf32>
    %3 = tpu.matmul %2, %1, %cst {dimension_numbers = #tpu.dot_dimension_numbers<[1], [0], [0], [1], [0, 0, 1, 1], [], []>} : vector<32x3xf32>, vector<3x256xf32>, vector<32x256xf32> -> vector<32x256xf32>
    %c0_4 = arith.constant 0 : index
    %c0_5 = arith.constant 0 : index
    %4 = vector.load %arg3[%c0_4, %c0_5] : memref<32x1xf32, #tpu.memory_space<vmem>>, vector<32x1xf32>
    %5 = vector.broadcast %4 : vector<32x1xf32> to vector<32x256xf32>
    %6 = arith.addf %3, %5 : vector<32x256xf32>
    %c0_6 = arith.constant 0 : index
    %c0_7 = arith.constant 0 : index
    %c0_8 = arith.constant 0 : index
    %7 = vector.load %arg4[%c0_6, %c0_7, %c0_8] : memref<1x32x256xf32, #tpu.memory_space<vmem>>, vector<1x32x256xf32>
    %8 = vector.shape_cast %7 : vector<1x32x256xf32> to vector<32x256xf32>
    %9 = vector.shape_cast %6 : vector<32x256xf32> to vector<1x32x256xf32>
    tpu.vector_store %arg4[%c0_6, %c0_7, %c0_8], %9 {strides = array<i32>} : memref<1x32x256xf32, #tpu.memory_space<vmem>>, vector<1x32x256xf32>,
    return
  }
  func.func @transform_0(%arg0: i32) -> (i32, i32, i32) {
    %c0_i32 = arith.constant 0 : i32
    %c0_i32_0 = arith.constant 0 : i32
    %c0_i32_1 = arith.constant 0 : i32
    return %arg0, %c0_i32, %c0_i32_0 : i32, i32, i32
  }
  func.func @transform_1(%arg0: i32) -> (i32, i32) {
    %c0_i32 = arith.constant 0 : i32
    %c0_i32_0 = arith.constant 0 : i32
    %c0_i32_1 = arith.constant 0 : i32
    return %c0_i32, %c0_i32_0 : i32, i32
  }
  func.func @transform_2(%arg0: i32) -> (i32, i32) {
    %c0_i32 = arith.constant 0 : i32
    %c0_i32_0 = arith.constant 0 : i32
    %c0_i32_1 = arith.constant 0 : i32
    return %c0_i32, %c0_i32_0 : i32, i32
  }
  func.func @transform_3(%arg0: i32) -> (i32, i32, i32) {
    %c0_i32 = arith.constant 0 : i32
    %c0_i32_0 = arith.constant 0 : i32
    %c0_i32_1 = arith.constant 0 : i32
    return %arg0, %c0_i32, %c0_i32_0 : i32, i32, i32
  }
}

</mosaic_0001>

<llo_original>
// kernel: tpu_custom_call.1
$region0: #{tpu_custom_call.1}
  #allocation0 [shape = 'u32[]', space=smem, size = 0x4, offset = 0x4, fixed_abs, tag = 'smem constant byte address 0x4 - core index']
  #allocation1 [shape = 'u32[144,128]{1,0:T(1,128)}', space=vmem, size = 0x12000, scoped, tag = 'internal scratch']
  %s0 = inlined_call_operand.vmem [shape: f32[2,3,256], index: 0, kind: input, shape index: {}]
  %s1 = inlined_call_operand.vmem [shape: f32[32,3], index: 1, kind: input, shape index: {}]
  %s2 = inlined_call_operand.vmem [shape: f32[32,1], index: 2, kind: input, shape index: {}]
  %s3 = inlined_call_operand.hbm [shape: f32[2,32,256], index: 3, kind: output, shape index: {}]
  %s4 = sld [smem:[#allocation0]]
  $region45: #{tpu_custom_call.1} parent=0
    _
  %s6 = ssub.s32 1, %s4
  %s7 = scalar_select 0, %s6, %s4
  $region1: #{tpu_custom_call.1} parent=0
    #allocation2 [shape = 'u8[65536]{0}', space=vmem, size = 0x10000, scoped, tag = 'output window, operand 0']
    #allocation3 [shape = 's32[2]{0}', space=sflag, size = 0x8, scoped, tag = 'scoped memory for tpu_custom_call.1']
    %8 = vsyncpa [#allocation3], 0
    %s9 = scalar_lea.sflag [#allocation3], 1
    %10 = vsyncpa %s9, 0
    loop: start=0, step=1, limit=4
    $region2: #{tpu_custom_call.1} parent=1 // loop_pre_header
      _
    $region3: #{tpu_custom_call.1} parent=1 // loop_header
      %s12 = sphi 0, %s16
      %p13 = scmp.ge.s32.totalorder %s12, 4
      %s22 = sphi 0, %s24
      %s25 = sphi 0, %s22
      %s26 = sphi 0, %s25
      %s42 = sphi 0, %s26
      %s46 = sphi 0, %s46
      %s48 = sphi 0, %s46
      %s49 = sphi 0, %s48
      %s63 = sphi 0, %s49
      %s67 = sphi 0, %s67
      %s69 = sphi 0, %s67
      %s70 = sphi 0, %s69
      %s84 = sphi 0, %s70
      %s90 = sphi 0, %s92
      %s93 = sphi 0, %s90
      %s94 = sphi 0, %s93
      %s110 = sphi 0, %s94
    $region4: #{tpu_custom_call.1} parent=1 // loop_header_branch
      %15 = sbr.rel (%p13) target = $region8
    $region5: #{tpu_custom_call.1} parent=1 // loop_body
      %s17 = ssub.s32 %s12, 1
      %s18 = ssub.s32 %s12, 2
      %s19 = sadd.s32 %s12, 1
      %s20 = ssub.s32 %s12, %s19
      %p21 = scmp.eq.s32.totalorder %s20, 0
      %s23 = sadd.s32 %s22, 1
      %s24 = scalar_select %p21, %s22, %s23
      %p27 = pneg %p21
      %p28 = scmp.eq.s32.totalorder %s12, 1
      %p29 = por %p27, %p28
      %p30 = scmp.ne.s32.totalorder %s22, %s25
      %p31 = scmp.eq.s32.totalorder %s12, 0
      %p32 = por %p30, %p31
      %p33 = scmp.ne.s32.totalorder %s22, %s25
      %p34 = scmp.eq.s32.totalorder %s17, 1
      %p35 = por %p33, %p34
      %p36 = scmp.ne.s32.totalorder %s25, %s26
      %p37 = scmp.eq.s32.totalorder %s17, 0
      %p38 = por %p36, %p37
      %p39 = scmp.ne.s32.totalorder %s25, %s26
      %p40 = scmp.eq.s32.totalorder %s18, 1
      %p41 = por %p39, %p40
      %p43 = scmp.ne.s32.totalorder %s26, %s42
      %p44 = scmp.eq.s32.totalorder %s18, 0
      %p45 = por %p43, %p44
      %s47 = sadd.s32 %s46, 1
      %p50 = scmp.eq.s32.totalorder %s12, 1
      %p51 = scmp.ne.s32.totalorder %s46, %s48
      %p52 = scmp.eq.s32.totalorder %s12, 0
      %p53 = por %p51, %p52
      %p54 = scmp.ne.s32.totalorder %s46, %s48
      %p55 = scmp.eq.s32.totalorder %s17, 1
      %p56 = por %p54, %p55
      %p57 = scmp.ne.s32.totalorder %s48, %s49
      %p58 = scmp.eq.s32.totalorder %s17, 0
      %p59 = por %p57, %p58
      %p60 = scmp.ne.s32.totalorder %s48, %s49
      %p61 = scmp.eq.s32.totalorder %s18, 1
      %p62 = por %p60, %p61
      %p64 = scmp.ne.s32.totalorder %s49, %s63
      %p65 = scmp.eq.s32.totalorder %s18, 0
      %p66 = por %p64, %p65
      %s68 = sadd.s32 %s67, 1
      %p71 = scmp.eq.s32.totalorder %s12, 1
      %p72 = scmp.ne.s32.totalorder %s67, %s69
      %p73 = scmp.eq.s32.totalorder %s12, 0
      %p74 = por %p72, %p73
      %p75 = scmp.ne.s32.totalorder %s67, %s69
      %p76 = scmp.eq.s32.totalorder %s17, 1
      %p77 = por %p75, %p76
      %p78 = scmp.ne.s32.totalorder %s69, %s70
      %p79 = scmp.eq.s32.totalorder %s17, 0
      %p80 = por %p78, %p79
      %p81 = scmp.ne.s32.totalorder %s69, %s70
      %p82 = scmp.eq.s32.totalorder %s18, 1
      %p83 = por %p81, %p82
      %p85 = scmp.ne.s32.totalorder %s70, %s84
      %p86 = scmp.eq.s32.totalorder %s18, 0
      %p87 = por %p85, %p86
      %s88 = ssub.s32 %s12, %s19
      %p89 = scmp.eq.s32.totalorder %s88, 0
      %s91 = sadd.s32 %s90, 1
      %s92 = scalar_select %p89, %s90, %s91
      %p95 = pneg %p89
      %p96 = scmp.eq.s32.totalorder %s12, 1
      %p97 = por %p95, %p96
      %p98 = scmp.ne.s32.totalorder %s90, %s93
      %p99 = scmp.eq.s32.totalorder %s12, 0
      %p100 = por %p98, %p99
      %p101 = scmp.ne.s32.totalorder %s90, %s93
      %p102 = scmp.eq.s32.totalorder %s17, 1
      %p103 = por %p101, %p102
      %p104 = scmp.ne.s32.totalorder %s93, %s94
      %p105 = scmp.eq.s32.totalorder %s17, 0
      %p106 = por %p104, %p105
      %p107 = scmp.ne.s32.totalorder %s93, %s94
      %p108 = scmp.eq.s32.totalorder %s18, 1
      %p109 = por %p107, %p108
      %p111 = scmp.ne.s32.totalorder %s94, %s110
      %p112 = scmp.eq.s32.totalorder %s18, 0
      %p113 = por %p111, %p112
      %p114 = scmp.le.s32.totalorder 1, %s12
      %p115 = scmp.lt.s32.totalorder %s12, 3
      %p116 = pnand %p114, %p115
      %p117 = pneg %p116
      // Predicated region
      $region9: #{tpu_custom_call.1} parent=5 // pred_check
        _
      $region10: #{tpu_custom_call.1} parent=5 // pred_check_branch
        %119 = sbr.rel (%p116) target = $region12
      $region11: #{tpu_custom_call.1} parent=5 // pred_region
        %s120 = ssub.s32 %s12, 1
        // Predicated region
        $region13: #{tpu_custom_call.1} parent=11 // pred_check
          %p121 = pneg %p59
        $region14: #{tpu_custom_call.1} parent=11 // pred_check_branch
          %123 = sbr.rel (%p121) target = $region16
        $region15: #{tpu_custom_call.1} parent=11 // pred_region
          _
        $region16: #{tpu_custom_call.1} parent=11 // pred_fallthru
          _
        // Predicated region
        $region17: #{tpu_custom_call.1} parent=11 // pred_check
          %p124 = pneg %p80
        $region18: #{tpu_custom_call.1} parent=11 // pred_check_branch
          %126 = sbr.rel (%p124) target = $region20
        $region19: #{tpu_custom_call.1} parent=11 // pred_region
          _
        $region20: #{tpu_custom_call.1} parent=11 // pred_fallthru
          _
      $region12: #{tpu_custom_call.1} parent=5 // pred_fallthru
        _
      %p127 = scmp.lt.s32.totalorder %s12, 2
      // Predicated region
      $region21: #{tpu_custom_call.1} parent=5 // pred_check
        %p128 = pneg %p127
      $region22: #{tpu_custom_call.1} parent=5 // pred_check_branch
        %130 = sbr.rel (%p128) target = $region24
      $region23: #{tpu_custom_call.1} parent=5 // pred_region
        // Predicated region
        $region25: #{tpu_custom_call.1} parent=23 // pred_check
          %p131 = pneg %p32
        $region26: #{tpu_custom_call.1} parent=23 // pred_check_branch
          %133 = sbr.rel (%p131) target = $region28
        $region27: #{tpu_custom_call.1} parent=23 // pred_region
          %p134 = scmp.lt.s32.totalorder %s12, 1
          %s135 = scalar_select %p134, %s12, 1
          %s136 = smul.addr %s135, 2
          %s137 = smul.addr %s136, 4
          %s138 = scalar_lea.vmem %s0, %s137
        $region28: #{tpu_custom_call.1} parent=23 // pred_fallthru
          _
      $region24: #{tpu_custom_call.1} parent=5 // pred_fallthru
        _
      %p139 = scmp.le.s32.totalorder 1, %s12
      %p140 = scmp.lt.s32.totalorder %s12, 3
      %p141 = pnand %p139, %p140
      %p142 = pneg %p141
      // Predicated region
      $region29: #{tpu_custom_call.1} parent=5 // pred_check
        _
      $region30: #{tpu_custom_call.1} parent=5 // pred_check_branch
        %144 = sbr.rel (%p141) target = $region32
      $region31: #{tpu_custom_call.1} parent=5 // pred_region
        %s145 = ssub.s32 %s12, 1
        %p146 = scmp.lt.s32.totalorder %s17, 1
        %s147 = scalar_select %p146, %s17, 1
        %s148 = smul.addr %s147, 2
        %s149 = smul.addr %s148, 4
        %s150 = scalar_lea.vmem %s0, %s149
        %p151 = pneg %p38
        %p152 = pneg %p35
        %p153 = pneg %p59
        %p154 = pneg %p56
        %p155 = pneg %p80
        %p156 = pneg %p77
        %p157 = pneg %p106
        %p158 = pneg %p103
        %s159 = sand.u32 %s93, 1
        %s160 = scalar_lea.sflag [#allocation3], %s159
        %s161 = sand.u32 %s93, 1
        %s162 = smul.addr %s161, 64
        %s163 = scalar_lea.vmem [#allocation2], %s162
        %p164 = scmp.lt.s32.totalorder %s17, 1
        %s165 = scalar_select %p164, %s17, 1
        %s166 = smul.addr %s165, 2
        %s167 = smul.addr %s166, 4
        %s168 = scalar_lea.vmem %s0, %s167
        %v169 = vld [vmem:[%s168] sm:$0x77]
        %v170 = vld [vmem:[%s1] sm:$0xff]
        %v171 = vld [vmem:[%s1 + $0x8] sm:$0xff]
        %v172 = vld [vmem:[%s1 + $0x10] sm:$0xff]
        %v173 = vld [vmem:[%s1 + $0x18] sm:$0xff]
        %v174 = vld [vmem:[%s2] sm:$0xff]
        %v175 = vld [vmem:[%s2 + $0x8] sm:$0xff]
        %v176 = vld [vmem:[%s2 + $0x10] sm:$0xff]
        %v177 = vld [vmem:[%s2 + $0x18] sm:$0xff]
        %179 = vset.pattern.permute.xlu0 0
        %180 = vperm.xlu0 %179, %v174
        %v181 = vpop.permute.xlu0 %180
        %184 = vset.pattern.permute.xlu0 0
        %185 = vperm.xlu0 %184, %v175
        %v186 = vpop.permute.xlu0 %185
        %189 = vset.pattern.permute.xlu0 0
        %190 = vperm.xlu0 %189, %v176
        %v191 = vpop.permute.xlu0 %190
        %194 = vset.pattern.permute.xlu0 0
        %195 = vperm.xlu0 %194, %v177
        %v196 = vpop.permute.xlu0 %195
        %v199 = vcombine.high %v169, %v169
        %vm200 = vcmask 23552
        %v202 = vsel %vm200, %v170, 0
        %v205 = vsel %vm200, %v171, 0
        %v208 = vsel %vm200, %v172, 0
        %v211 = vsel %vm200, %v173, 0
        %vm213 = vcmask 1042432
        %v214 = vsel %vm213, %v169, 0
        %v216 = vsel %vm213, %v199, 0
        %218 = vmatprep.subr.mxu0 %v216
        %219 = vmatpush1.msra.mxu0 %v214
        %220 = vmatprep.subr.mxu0 0.0
        %221 = vmatpush1.msra.mxu0 0.0
        %222 = vmatprep.subr.mxu0 0.0
        %223 = vmatpush1.msra.mxu0 0.0
        %224 = vmatprep.subr.mxu0 0.0
        %225 = vmatpush1.msra.mxu0 0.0
        %226 = vmatprep.subr.mxu0 0.0
        %227 = vmatpush1.msra.mxu0 0.0
        %228 = vmatprep.subr.mxu0 0.0
        %229 = vmatpush1.msra.mxu0 0.0
        %230 = vmatprep.subr.mxu0 0.0
        %231 = vmatpush1.msra.mxu0 0.0
        %232 = vmatprep.subr.mxu0 0.0
        %233 = vmatpush1.msra.mxu0 0.0
        %234 = vmatprep.subr.mxu0 0.0
        %235 = vmatpush1.msra.mxu0 0.0
        %236 = vmatprep.subr.mxu0 0.0
        %237 = vmatpush1.msra.mxu0 0.0
        %238 = vmatprep.subr.mxu0 0.0
        %239 = vmatpush1.msra.mxu0 0.0
        %240 = vmatprep.subr.mxu0 0.0
        %241 = vmatpush1.msra.mxu0 0.0
        %242 = vmatprep.subr.mxu0 0.0
        %243 = vmatpush1.msra.mxu0 0.0
        %244 = vmatprep.subr.mxu0 0.0
        %245 = vmatpush1.msra.mxu0 0.0
        %246 = vmatprep.subr.mxu0 0.0
        %247 = vmatpush1.msra.mxu0 0.0
        %248 = vmatprep.subr.mxu0 0.0
        %249 = vmatpush1.msra.mxu0 0.0
        %250 = vmatprep.subr.mxu0 0.0
        %251 = vmatpush1.msra.mxu0 0.0
        %252 = vmatprep.subr.mxu0 0.0
        %253 = vmatpush1.msra.mxu0 0.0
        %254 = vmatprep.subr.mxu0 0.0
        %255 = vmatpush1.msra.mxu0 0.0
        %256 = vmatprep.subr.mxu0 0.0
        %257 = vmatpush1.msra.mxu0 0.0
        %258 = vmatprep.subr.mxu0 0.0
        %259 = vmatpush1.msra.mxu0 0.0
        %260 = vmatprep.subr.mxu0 0.0
        %261 = vmatpush1.msra.mxu0 0.0
        %262 = vmatprep.subr.mxu0 0.0
        %263 = vmatpush1.msra.mxu0 0.0
        %264 = vmatprep.subr.mxu0 0.0
        %265 = vmatpush1.msra.mxu0 0.0
        %266 = vmatprep.subr.mxu0 0.0
        %267 = vmatpush1.msra.mxu0 0.0
        %268 = vmatprep.subr.mxu0 0.0
        %269 = vmatpush1.msra.mxu0 0.0
        %270 = vmatprep.subr.mxu0 0.0
        %271 = vmatpush1.msra.mxu0 0.0
        %272 = vmatprep.subr.mxu0 0.0
        %273 = vmatpush1.msra.mxu0 0.0
        %274 = vmatprep.subr.mxu0 0.0
        %275 = vmatpush1.msra.mxu0 0.0
        %276 = vmatprep.subr.mxu0 0.0
        %277 = vmatpush1.msra.mxu0 0.0
        %278 = vmatprep.subr.mxu0 0.0
        %279 = vmatpush1.msra.mxu0 0.0
        %280 = vmatprep.subr.mxu0 0.0
        %281 = vmatpush1.msra.mxu0 0.0
        %282 = vmatprep.mubr.f32.mxu0 0.0
        %283 = vmatmul.mubr.f32.gmra.mrb[0].mxu0 %v202
        %v284 = vpop.f32.mrb[0].mxu0
        %v285 = vadd.f32 %v181, %v284
        %v286 = vpop.f32.mrb[0].mxu0
        %v287 = vadd.f32 %v181, %v286
        %288 = vmatprep.mubr.f32.mxu0 0.0
        %289 = vmatmul.mubr.f32.gmra.mrb[0].mxu0 %v205
        %v290 = vpop.f32.mrb[0].mxu0
        %v291 = vadd.f32 %v186, %v290
        %v292 = vpop.f32.mrb[0].mxu0
        %v293 = vadd.f32 %v186, %v292
        %294 = vmatprep.mubr.f32.mxu0 0.0
        %295 = vmatmul.mubr.f32.gmra.mrb[0].mxu0 %v208
        %v296 = vpop.f32.mrb[0].mxu0
        %v297 = vadd.f32 %v191, %v296
        %v298 = vpop.f32.mrb[0].mxu0
        %v299 = vadd.f32 %v191, %v298
        %300 = vmatprep.mubr.f32.mxu0 0.0
        %301 = vmatmul.mubr.f32.gmra.mrb[0].mxu0 %v211
        %v302 = vpop.f32.mrb[0].mxu0
        %v303 = vadd.f32 %v196, %v302
        %v304 = vpop.f32.mrb[0].mxu0
        %v305 = vadd.f32 %v196, %v304
        %306 = vdwg.mxu0
        %307 = vst [vmem:[%s163] sm:$0xff] %v285
        %308 = vst [vmem:[%s163 + $0x8] sm:$0xff] %v287
        %309 = vst [vmem:[%s163 + $0x10] sm:$0xff] %v291
        %310 = vst [vmem:[%s163 + $0x18] sm:$0xff] %v293
        %311 = vst [vmem:[%s163 + $0x20] sm:$0xff] %v297
        %312 = vst [vmem:[%s163 + $0x28] sm:$0xff] %v299
        %313 = vst [vmem:[%s163 + $0x30] sm:$0xff] %v303
        %314 = vst [vmem:[%s163 + $0x38] sm:$0xff] %v305
        %s315 = sand.u32 %s93, 1
        %s316 = scalar_lea.sflag [#allocation3], %s315
        %s317 = sand.u32 %s93, 1
        %s318 = smul.addr %s317, 64
        %s319 = scalar_lea.vmem [#allocation2], %s318
        // Predicated region
        $region33: #{tpu_custom_call.1} parent=31 // pred_check
          %p320 = pneg %p103
        $region34: #{tpu_custom_call.1} parent=31 // pred_check_branch
          %322 = sbr.rel (%p320) target = $region36
        $region35: #{tpu_custom_call.1} parent=31 // pred_region
          %s324 = ssub.s32 1024, 1024
          %325 = vsyncadd %s316, %s324
          %s326 = smul.addr %s17, 8
          %s327 = smul.addr %s326, 128
          %s328 = scalar_lea.hbm %s3, %s327
          %s329 = sshll.u32 %s319, 4
          %s330 = int_to_ptr.vmem [resolvable:$true] %s329
          %335 = dma.vmem_to_hbm [thread:$0]  %s330, 1024, %s328, %s316, 256, 256, 16
        $region36: #{tpu_custom_call.1} parent=31 // pred_fallthru
          _
      $region32: #{tpu_custom_call.1} parent=5 // pred_fallthru
        _
      %p336 = scmp.le.s32.totalorder 2, %s12
      // Predicated region
      $region37: #{tpu_custom_call.1} parent=5 // pred_check
        %p337 = pneg %p336
      $region38: #{tpu_custom_call.1} parent=5 // pred_check_branch
        %339 = sbr.rel (%p337) target = $region40
      $region39: #{tpu_custom_call.1} parent=5 // pred_region
        %s340 = ssub.s32 %s12, 2
        // Predicated region
        $region41: #{tpu_custom_call.1} parent=39 // pred_check
          %p341 = pneg %p109
        $region42: #{tpu_custom_call.1} parent=39 // pred_check_branch
          %343 = sbr.rel (%p341) target = $region44
        $region43: #{tpu_custom_call.1} parent=39 // pred_region
          %s344 = sand.u32 %s94, 1
          %s345 = scalar_lea.sflag [#allocation3], %s344
          %s346 = sand.u32 %s94, 1
          %s347 = smul.addr %s346, 64
          %s348 = scalar_lea.vmem [#allocation2], %s347
          %349 = dma.done %s345, 1024
        $region44: #{tpu_custom_call.1} parent=39 // pred_fallthru
          _
      $region40: #{tpu_custom_call.1} parent=5 // pred_fallthru
        _
    $region6: #{tpu_custom_call.1} parent=1 // loop_footer
      %s16 = sadd.s32 1, %s12
    $region7: #{tpu_custom_call.1} parent=1 // loop_footer_branch
      %11 = sbr.rel target = $region3
    $region8: #{tpu_custom_call.1} parent=1 // loop_exit
      _
    %350 = vsyncpa [#allocation3], 1
    %s351 = scalar_lea.sflag [#allocation3], 1
    %352 = vsyncpa %s351, 1

</llo_original>
